<compile_context>
chip_gen: v6e
topology: v6e:2x2x1
jax: 0.10.0
libtpu: 0.0.40
codegen_flags: <defaults>
</compile_context>

<pallas_src>
import functools

import jax
import jax.numpy as jnp
from jax.experimental import pallas as pl
from jax.experimental.pallas import tpu as pltpu


def _round_up(x, m):
    return ((x + m - 1) // m) * m


def _sublane_align(dtype):
    # f32/i32 -> 8, bf16/f16 -> 16, int8/bool -> 32 (packed sublane factor).
    return {4: 8, 2: 16, 1: 32}.get(jnp.dtype(dtype).itemsize, 8)


def _dice_kernel(preds_ref, targets_ref, dice_ref, inter_acc, union_acc, *,
                 smooth, tk, acc_width, rem):
    k = pl.program_id(1)
    nk = pl.num_programs(1)

    @pl.when(k == 0)
    def _():
        inter_acc[...] = jnp.zeros_like(inter_acc)
        union_acc[...] = jnp.zeros_like(union_acc)

    # Hot path: sigmoid (EUP), elementwise mul/add (VPU).
    p = jax.nn.sigmoid(preds_ref[...].astype(jnp.float32))   # (tb, tk)
    t = targets_ref[...].astype(jnp.float32)                  # (tb, tk)

    def _accumulate(p, t):
        prod = p * t
        tot = p + t
        if acc_width == 1:
            # Small-T fallback: direct per-row reduction.
            inter_acc[...] += jnp.sum(prod, axis=1, keepdims=True)
            union_acc[...] += jnp.sum(tot, axis=1, keepdims=True)
        else:
            # Lane-dense accumulation: fold the tile into (tb, 128) partials
            # with aligned 128-lane slices + VPU adds (no per-step XLU reduce).
            ip = inter_acc[...]
            up = union_acc[...]
            for c in range(tk // acc_width):
                sl = slice(c * acc_width, (c + 1) * acc_width)
                ip = ip + prod[:, sl]
                up = up + tot[:, sl]
            inter_acc[...] = ip
            union_acc[...] = up

    if rem == 0:
        # T is a multiple of tk: no ragged mask anywhere.
        _accumulate(p, t)
    else:
        # Only the final time tile is ragged; pay the mask there only.
        @pl.when(k < nk - 1)
        def _():
            _accumulate(p, t)

        @pl.when(k == nk - 1)
        def _():
            lane = jax.lax.broadcasted_iota(jnp.int32, p.shape, 1)
            in_bounds = lane < rem          # static remainder
            _accumulate(jnp.where(in_bounds, p, 0.0),
                        jnp.where(in_bounds, t, 0.0))

    @pl.when(k == nk - 1)
    def _():
        if acc_width == 1:
            inter = inter_acc[...]
            union = union_acc[...]
        else:
            # Single cross-lane XLU reduce per row block, done once.
            inter = jnp.sum(inter_acc[...], axis=1, keepdims=True)
            union = jnp.sum(union_acc[...], axis=1, keepdims=True)
        dice_ref[...] = (2.0 * inter + smooth) / (union + smooth)


def dice_loss(preds, targets, smooth=1.0):
    """preds, targets: (batch, time_step). Returns scalar float32 dice loss.

    preds may be f32/bf16/f16; targets may be f32/bf16/int8/bool.  All
    accumulation is in f32 inside the kernel.
    """
    assert preds.shape == targets.shape and preds.ndim == 2
    if targets.dtype == jnp.bool_:
        targets = targets.astype(jnp.int8)
    B, T = preds.shape

    p_item = jnp.dtype(preds.dtype).itemsize
    t_item = jnp.dtype(targets.dtype).itemsize
    align = max(_sublane_align(preds.dtype), _sublane_align(targets.dtype))

    # --- batch tile -------------------------------------------------------
    # Keep >= 2 batch blocks when B is large enough so a two-TensorCore part
    # (v7x) can split the 'parallel' axis; cap at 512 rows per block.
    if B <= align:
        tb = B
    else:
        tb = min(512, _round_up(pl.cdiv(B, 2), align))

    # --- time tile --------------------------------------------------------
    # Budget: 2 pipeline buffers x (preds + targets) tiles <= ~24 MiB, which
    # is safe on all parts (v7x: 64 MiB physical / 32 MiB scoped default).
    VMEM_INPUT_BUDGET = 24 * 1024 * 1024
    bytes_per_col = 2 * tb * (p_item + t_item)          # double-buffered
    max_tk = max(128, VMEM_INPUT_BUDGET // bytes_per_col)
    tk_cap = max(128, min(8192, (max_tk // 128) * 128))

    if T <= 128:
        tk = T
    else:
        tk = min(_round_up(T, 128), tk_cap)
        if T % tk != 0:
            # Prefer a multiple-of-128 divisor of T (mask disappears at trace
            # time) as long as it doesn't shrink the tile by more than 2x.
            for cand in range(tk, 127, -128):
                if T % cand == 0:
                    if cand * 2 >= tk:
                        tk = cand
                    break

    nb = pl.cdiv(B, tb)
    nk = pl.cdiv(T, tk)
    acc_width = 128 if (tk >= 128 and tk % 128 == 0) else 1
    rem = T % tk if T % tk != 0 else 0

    kernel = functools.partial(
        _dice_kernel, smooth=float(smooth), tk=tk, acc_width=acc_width, rem=rem)

    cost = pl.CostEstimate(
        flops=8 * B * T,
        transcendentals=B * T,
        bytes_accessed=B * T * (p_item + t_item) + B * 4,
    )

    dice = pl.pallas_call(
        kernel,
        out_shape=jax.ShapeDtypeStruct((B, 1), jnp.float32),
        grid_spec=pltpu.PrefetchScalarGridSpec(
            num_scalar_prefetch=0,
            grid=(nb, nk),
            in_specs=[
                pl.BlockSpec((tb, tk), lambda i, k: (i, k)),
                pl.BlockSpec((tb, tk), lambda i, k: (i, k)),
            ],
            out_specs=pl.BlockSpec((tb, 1), lambda i, k: (i, 0)),
            scratch_shapes=[
                pltpu.VMEM((tb, acc_width), jnp.float32),   # intersection acc
                pltpu.VMEM((tb, acc_width), jnp.float32),   # union acc
            ],
        ),
        compiler_params=pltpu.CompilerParams(
            dimension_semantics=("parallel", "arbitrary"),
            vmem_limit_bytes=48 * 1024 * 1024,
        ),
        cost_estimate=cost,
    )(preds, targets)

    # Trivial final mean in JAX (keeps the time-axis accumulator resident and
    # avoids cross-core accumulation when the batch axis is core-sharded).
    return 1.0 - jnp.mean(dice[:, 0])


def _dice_loss_ref(preds, targets, smooth=1.0):
    p = jax.nn.sigmoid(preds.astype(jnp.float32))
    t = targets.astype(jnp.float32)
    inter = jnp.sum(p * t, axis=1)
    union = jnp.sum(p, axis=1) + jnp.sum(t, axis=1)
    dice = (2.0 * inter + smooth) / (union + smooth)
    return 1.0 - jnp.mean(dice)


if __name__ == "__main__":
    key = jax.random.PRNGKey(0)
    k1, k2, k3, k4, k5, k6 = jax.random.split(key, 6)

    # 1) Tiny shape from the module's docstring: (batch, time_step) = (2, 8), f32.
    B, T = 2, 8
    preds = jax.random.normal(k1, (B, T), dtype=jnp.float32)
    targets = jax.random.bernoulli(k2, 0.5, (B, T)).astype(jnp.float32)
    loss = jax.block_until_ready(dice_loss(preds, targets, smooth=1.0))
    ref = _dice_loss_ref(preds, targets, smooth=1.0)
    assert jnp.allclose(loss, ref, atol=1e-5, rtol=1e-5), (loss, ref)

    # 2) Narrow-dtype contract (bf16 preds, int8 targets) + ragged time tile.
    B, T = 16, 300
    preds = jax.random.normal(k3, (B, T), dtype=jnp.bfloat16)
    targets = jax.random.bernoulli(k4, 0.5, (B, T)).astype(jnp.int8)
    loss = jax.block_until_ready(dice_loss(preds, targets, smooth=1.0))
    ref = _dice_loss_ref(preds, targets, smooth=1.0)
    assert jnp.allclose(loss, ref, atol=2e-3, rtol=2e-3), (loss, ref)

    # 3) Ragged batch (B % tb != 0), multiple time tiles, ragged last tile.
    B, T = 40, 20000
    preds = jax.random.normal(k5, (B, T), dtype=jnp.float32)
    targets = jax.random.bernoulli(k6, 0.5, (B, T)).astype(jnp.float32)
    loss = jax.block_until_ready(dice_loss(preds, targets, smooth=1.0))
    ref = _dice_loss_ref(preds, targets, smooth=1.0)
    assert jnp.allclose(loss, ref, atol=5e-4, rtol=5e-4), (loss, ref)

    print("KERNEL_OK")
</pallas_src>

<mosaic_0001>
module attributes {stable_mosaic.version = 11 : i64} {
  func.func @_dice_kernel(%arg0: i32, %arg1: i32, %arg2: memref<2x8xf32, #tpu.memory_space<vmem>>, %arg3: memref<2x8xf32, #tpu.memory_space<vmem>>, %arg4: memref<2x1xf32, #tpu.memory_space<vmem>>, %arg5: memref<2x1xf32, #tpu.memory_space<vmem>>, %arg6: memref<2x1xf32, #tpu.memory_space<vmem>>) attributes {dimension_semantics = [#tpu.dimension_semantics<parallel>, #tpu.dimension_semantics<arbitrary>], iteration_bounds = array<i64: 1, 1>, scalar_prefetch = 0 : i64, scratch_operands = 2 : i64, tpu.core_type = #tpu.core_type<tc>, window_params = [{transform_indices = @transform_0, window_bounds = array<i64: 2, 8>}, {transform_indices = @transform_1, window_bounds = array<i64: 2, 8>}, {transform_indices = @transform_2, window_bounds = array<i64: 2, 1>}]} {
    %c0_i32 = arith.constant 0 : i32
    %0 = arith.cmpi eq, %arg1, %c0_i32 : i32
    %1 = arith.extui %0 : i1 to i32
    %c0_i32_0 = arith.constant 0 : i32
    %2 = arith.cmpi ne, %1, %c0_i32_0 : i32
    scf.if %2 {
      %cst_16 = arith.constant 0.000000e+00 : f32
      %25 = vector.broadcast %cst_16 : f32 to vector<2x1xf32>
      %c0_17 = arith.constant 0 : index
      %c0_18 = arith.constant 0 : index
      %26 = vector.load %arg5[%c0_17, %c0_18] : memref<2x1xf32, #tpu.memory_space<vmem>>, vector<2x1xf32>
      tpu.vector_store %arg5[%c0_17, %c0_18], %25 {strides = array<i32>} : memref<2x1xf32, #tpu.memory_space<vmem>>, vector<2x1xf32>,
      %cst_19 = arith.constant 0.000000e+00 : f32
      %27 = vector.broadcast %cst_19 : f32 to vector<2x1xf32>
      %c0_20 = arith.constant 0 : index
      %c0_21 = arith.constant 0 : index
      %28 = vector.load %arg6[%c0_20, %c0_21] : memref<2x1xf32, #tpu.memory_space<vmem>>, vector<2x1xf32>
      tpu.vector_store %arg6[%c0_20, %c0_21], %27 {strides = array<i32>} : memref<2x1xf32, #tpu.memory_space<vmem>>, vector<2x1xf32>,
    } else {
    }
    %c0 = arith.constant 0 : index
    %c0_1 = arith.constant 0 : index
    %3 = vector.load %arg2[%c0, %c0_1] : memref<2x8xf32, #tpu.memory_space<vmem>>, vector<2x8xf32>
    %4 = arith.negf %3 : vector<2x8xf32>
    %5 = math.exp %4 : vector<2x8xf32>
    %cst = arith.constant 1.000000e+00 : f32
    %6 = vector.broadcast %cst : f32 to vector<2x8xf32>
    %7 = arith.addf %6, %5 : vector<2x8xf32>
    %8 = arith.divf %6, %7 : vector<2x8xf32>
    %c0_2 = arith.constant 0 : index
    %c0_3 = arith.constant 0 : index
    %9 = vector.load %arg3[%c0_2, %c0_3] : memref<2x8xf32, #tpu.memory_space<vmem>>, vector<2x8xf32>
    %10 = arith.mulf %8, %9 : vector<2x8xf32>
    %11 = arith.addf %8, %9 : vector<2x8xf32>
    %c0_4 = arith.constant 0 : index
    %c0_5 = arith.constant 0 : index
    %12 = vector.load %arg5[%c0_4, %c0_5] : memref<2x1xf32, #tpu.memory_space<vmem>>, vector<2x1xf32>
    %cst_6 = arith.constant dense<0.000000e+00> : vector<2xf32>
    %13 = vector.multi_reduction <add>, %10, %cst_6 [1] : vector<2x8xf32> to vector<2xf32>
    %14 = vector.shape_cast %13 : vector<2xf32> to vector<2x1xf32>
    %15 = arith.addf %12, %14 : vector<2x1xf32>
    %c0_7 = arith.constant 0 : index
    %c0_8 = arith.constant 0 : index
    %16 = vector.load %arg5[%c0_7, %c0_8] : memref<2x1xf32, #tpu.memory_space<vmem>>, vector<2x1xf32>
    tpu.vector_store %arg5[%c0_7, %c0_8], %15 {strides = array<i32>} : memref<2x1xf32, #tpu.memory_space<vmem>>, vector<2x1xf32>,
    %c0_9 = arith.constant 0 : index
    %c0_10 = arith.constant 0 : index
    %17 = vector.load %arg6[%c0_9, %c0_10] : memref<2x1xf32, #tpu.memory_space<vmem>>, vector<2x1xf32>
    %cst_11 = arith.constant dense<0.000000e+00> : vector<2xf32>
    %18 = vector.multi_reduction <add>, %11, %cst_11 [1] : vector<2x8xf32> to vector<2xf32>
    %19 = vector.shape_cast %18 : vector<2xf32> to vector<2x1xf32>
    %20 = arith.addf %17, %19 : vector<2x1xf32>
    %c0_12 = arith.constant 0 : index
    %c0_13 = arith.constant 0 : index
    %21 = vector.load %arg6[%c0_12, %c0_13] : memref<2x1xf32, #tpu.memory_space<vmem>>, vector<2x1xf32>
    tpu.vector_store %arg6[%c0_12, %c0_13], %20 {strides = array<i32>} : memref<2x1xf32, #tpu.memory_space<vmem>>, vector<2x1xf32>,
    %c0_i32_14 = arith.constant 0 : i32
    %22 = arith.cmpi eq, %arg1, %c0_i32_14 : i32
    %23 = arith.extui %22 : i1 to i32
    %c0_i32_15 = arith.constant 0 : i32
    %24 = arith.cmpi ne, %23, %c0_i32_15 : i32
    scf.if %24 {
      %c0_16 = arith.constant 0 : index
      %c0_17 = arith.constant 0 : index
      %25 = vector.load %arg5[%c0_16, %c0_17] : memref<2x1xf32, #tpu.memory_space<vmem>>, vector<2x1xf32>
      %c0_18 = arith.constant 0 : index
      %c0_19 = arith.constant 0 : index
      %26 = vector.load %arg6[%c0_18, %c0_19] : memref<2x1xf32, #tpu.memory_space<vmem>>, vector<2x1xf32>
      %cst_20 = arith.constant 2.000000e+00 : f32
      %27 = vector.broadcast %cst_20 : f32 to vector<2x1xf32>
      %28 = arith.mulf %27, %25 : vector<2x1xf32>
      %cst_21 = arith.constant 1.000000e+00 : f32
      %29 = vector.broadcast %cst_21 : f32 to vector<2x1xf32>
      %30 = arith.addf %28, %29 : vector<2x1xf32>
      %cst_22 = arith.constant 1.000000e+00 : f32
      %31 = vector.broadcast %cst_22 : f32 to vector<2x1xf32>
      %32 = arith.addf %26, %31 : vector<2x1xf32>
      %33 = arith.divf %30, %32 : vector<2x1xf32>
      %c0_23 = arith.constant 0 : index
      %c0_24 = arith.constant 0 : index
      %34 = vector.load %arg4[%c0_23, %c0_24] : memref<2x1xf32, #tpu.memory_space<vmem>>, vector<2x1xf32>
      tpu.vector_store %arg4[%c0_23, %c0_24], %33 {strides = array<i32>} : memref<2x1xf32, #tpu.memory_space<vmem>>, vector<2x1xf32>,
    } else {
    }
    return
  }
  func.func @transform_0(%arg0: i32, %arg1: i32) -> (i32, i32) {
    %c0_i32 = arith.constant 0 : i32
    return %arg0, %arg1 : i32, i32
  }
  func.func @transform_1(%arg0: i32, %arg1: i32) -> (i32, i32) {
    %c0_i32 = arith.constant 0 : i32
    return %arg0, %arg1 : i32, i32
  }
  func.func @transform_2(%arg0: i32, %arg1: i32) -> (i32, i32) {
    %c0_i32 = arith.constant 0 : i32
    %c0_i32_0 = arith.constant 0 : i32
    return %arg0, %c0_i32 : i32, i32
  }
}

</mosaic_0001>

<llo_original>
// kernel: tpu_custom_call.1
$region0: #{tpu_custom_call.1}
  #allocation0 [shape = 'u32[]', space=smem, size = 0x4, offset = 0x4, fixed_abs, tag = 'smem constant byte address 0x4 - core index']
  #allocation1 [shape = 'u32[144,128]{1,0:T(1,128)}', space=vmem, size = 0x12000, scoped, tag = 'internal scratch']
  #allocation2 [shape = 'f32[2,1]{1,0:T(2,128)}', space=vmem, size = 0x400, scoped, tag = 'scratch operand']
  #allocation3 [shape = 'f32[2,1]{1,0:T(2,128)}', space=vmem, size = 0x400, scoped, tag = 'scratch operand']
  %s0 = inlined_call_operand.hbm [shape: f32[2,8], index: 0, kind: input, shape index: {}]
  %s1 = inlined_call_operand.hbm [shape: f32[2,8], index: 1, kind: input, shape index: {}]
  %s2 = inlined_call_operand.vmem [shape: f32[2,1], index: 2, kind: output, shape index: {}]
  %s3 = sld [smem:[#allocation0]]
  $region34: #{tpu_custom_call.1} parent=0
    _
  %s5 = ssub.s32 1, %s3
  %s6 = scalar_select 0, %s5, %s3
  $region1: #{tpu_custom_call.1} parent=0
    #allocation4 [shape = 'u8[1024]{0}', space=vmem, size = 0x400, scoped, tag = 'input window, operand 0, single buffered']
    #allocation5 [shape = 's32[1]{0}', space=sflag, size = 0x4, scoped, tag = 'scoped memory for tpu_custom_call.1']
    #allocation6 [shape = 'u8[1024]{0}', space=vmem, size = 0x400, scoped, tag = 'input window, operand 1, single buffered']
    #allocation7 [shape = 's32[1]{0}', space=sflag, size = 0x4, scoped, tag = 'scoped memory for tpu_custom_call.1']
    %7 = vsyncpa [#allocation5], 0
    %8 = vsyncpa [#allocation7], 0
    // Predicated region
    $region2: #{tpu_custom_call.1} parent=1 // pred_check
      _
    $region3: #{tpu_custom_call.1} parent=1 // pred_check_branch
      %10 = sbr.rel (0) target = $region5
    $region4: #{tpu_custom_call.1} parent=1 // pred_region
      %s12 = ssub.s32 32, 32
      %13 = vsyncadd [#allocation5], %s12
      %s15 = sshll.u32 [#allocation4], 4
      %s16 = int_to_ptr.vmem [resolvable:$true] %s15
      %18 = dma.hbm_to_vmem [thread:$0]  %s0, 32, %s16, [#allocation5]
    $region5: #{tpu_custom_call.1} parent=1 // pred_fallthru
      _
    // Predicated region
    $region6: #{tpu_custom_call.1} parent=1 // pred_check
      _
    $region7: #{tpu_custom_call.1} parent=1 // pred_check_branch
      %20 = sbr.rel (0) target = $region9
    $region8: #{tpu_custom_call.1} parent=1 // pred_region
      %s22 = ssub.s32 32, 32
      %23 = vsyncadd [#allocation7], %s22
      %s25 = sshll.u32 [#allocation6], 4
      %s26 = int_to_ptr.vmem [resolvable:$true] %s25
      %28 = dma.hbm_to_vmem [thread:$0]  %s1, 32, %s26, [#allocation7]
    $region9: #{tpu_custom_call.1} parent=1 // pred_fallthru
      _
    // Predicated region
    $region10: #{tpu_custom_call.1} parent=1 // pred_check
      _
    $region11: #{tpu_custom_call.1} parent=1 // pred_check_branch
      %30 = sbr.rel (0) target = $region13
    $region12: #{tpu_custom_call.1} parent=1 // pred_region
      %31 = dma.done [#allocation5], 32
    $region13: #{tpu_custom_call.1} parent=1 // pred_fallthru
      _
    // Predicated region
    $region14: #{tpu_custom_call.1} parent=1 // pred_check
      _
    $region15: #{tpu_custom_call.1} parent=1 // pred_check_branch
      %33 = sbr.rel (0) target = $region17
    $region16: #{tpu_custom_call.1} parent=1 // pred_region
      %34 = dma.done [#allocation7], 32
    $region17: #{tpu_custom_call.1} parent=1 // pred_fallthru
      _
    %p35 = scmp.eq.s32.totalorder 0, 0
    // Predicated region
    $region18: #{tpu_custom_call.1} parent=1 // pred_check
      %p36 = pneg %p35
    $region19: #{tpu_custom_call.1} parent=1 // pred_check_branch
      %38 = sbr.rel (%p36) target = $region21
    $region20: #{tpu_custom_call.1} parent=1 // pred_region
      %vm39 = vcmask 1024
      %40 = vst.msk [vmem:[#allocation2] sm:$0x3] %vm39, 0.0
      %41 = vst.msk [vmem:[#allocation3] sm:$0x3] %vm39, 0.0
    $region21: #{tpu_custom_call.1} parent=1 // pred_fallthru
      _
    %v42 = vld [vmem:[#allocation4] sm:$0x3]
    %v43 = vxor.u32 %v42, 2147483648
    %v44 = vmul.f32 %v43, 1.442695
    %v45 = vpow.pop %v44
    %v46 = vadd.f32 %v45, 1.0
    %v47 = vrcp.pop %v46
    %v48 = vmul.f32 1.0, %v47
    %v49 = vld [vmem:[#allocation6] sm:$0x3]
    %v50 = vmul.f32 %v48, %v49
    %v51 = vadd.f32 %v48, %v49
    %v52 = vld [vmem:[#allocation2] sm:$0x3]
    %vm53 = vcmask 58368
    %v54 = vsel %vm53, %v50, 0.0
    %55 = vadd.xlane.f32.xlu0 %v54
    %v56 = vpop.xlane.xlu0 %55
    %v57 = vadd.f32 %v52, %v56
    %vm58 = vcmask 1024
    %59 = vst.msk [vmem:[#allocation2] sm:$0x3] %vm58, %v57
    %v60 = vld [vmem:[#allocation3] sm:$0x3]
    %v61 = vsel %vm53, %v51, 0.0
    %62 = vadd.xlane.f32.xlu0 %v61
    %v63 = vpop.xlane.xlu0 %62
    %v64 = vadd.f32 %v60, %v63
    %65 = vst.msk [vmem:[#allocation3] sm:$0x3] %vm58, %v64
    // Predicated region
    $region22: #{tpu_custom_call.1} parent=1 // pred_check
      %p66 = pneg %p35
    $region23: #{tpu_custom_call.1} parent=1 // pred_check_branch
      %68 = sbr.rel (%p66) target = $region25
    $region24: #{tpu_custom_call.1} parent=1 // pred_region
      %v69 = vld [vmem:[#allocation2] sm:$0x3]
      %v70 = vld [vmem:[#allocation3] sm:$0x3]
      %v71 = vmul.f32 %v69, 2.0
      %v72 = vadd.f32 %v71, 1.0
      %v73 = vadd.f32 %v70, 1.0
      %v74 = vrcp.pop %v73
      %v75 = vmul.f32 %v72, %v74
      %76 = vst.msk [vmem:[%s2] sm:$0x3] %vm58, %v75
    $region25: #{tpu_custom_call.1} parent=1 // pred_fallthru
      _
    // Predicated region
    $region26: #{tpu_custom_call.1} parent=1 // pred_check
      _
    $region27: #{tpu_custom_call.1} parent=1 // pred_check_branch
      %78 = sbr.rel (0) target = $region29
    $region28: #{tpu_custom_call.1} parent=1 // pred_region
      _
    $region29: #{tpu_custom_call.1} parent=1 // pred_fallthru
      _
    // Predicated region
    $region30: #{tpu_custom_call.1} parent=1 // pred_check
      _
    $region31: #{tpu_custom_call.1} parent=1 // pred_check_branch
      %80 = sbr.rel (0) target = $region33
    $region32: #{tpu_custom_call.1} parent=1 // pred_region
      _
    $region33: #{tpu_custom_call.1} parent=1 // pred_fallthru
      _
    %81 = vsyncpa [#allocation5], 1
    %82 = vsyncpa [#allocation7], 1

</llo_original>
